<compile_context>
chip_gen: v6e
topology: v6e:2x2x1
jax: 0.10.0
libtpu: 0.0.40
codegen_flags: <defaults>
</compile_context>

<pallas_src>
import functools

import jax
import jax.numpy as jnp
from jax import lax
from jax.experimental import pallas as pl
from jax.experimental.pallas import tpu as pltpu


def _round_up(x, m):
    return (x + m - 1) // m * m


def _conv_bn_relu_kernel(x_ref, w_ref, scale_ref, shift_ref, o_ref, rhs_ref, *,
                         tap_offsets, c_in, tile_l, halo, apply_relu):
    # x_ref:     (C_in, L_flat)          bf16 flattened padded image (one batch elem)
    # w_ref:     (C_out_p, KH*KW*C_in)   bf16 fused conv weight (BN-unscaled)
    # scale_ref: (C_out_p, 1)            f32 BN scale = gamma * rsqrt(var + eps)
    # shift_ref: (C_out_p, 1)            f32 BN shift = beta - mean*scale (+bias*scale)
    # o_ref:     (C_out_p, tile_l)       bf16 output tile, channels x flat pixels
    # rhs_ref:   (KH*KW*C_in, tile_l)    VMEM scratch: tap stack (im2col in VMEM only)
    base = pl.multiple_of(pl.program_id(1) * tile_l, 128)   # 128-aligned tile start
    win = x_ref[:, pl.ds(base, tile_l + halo)]               # one aligned dynamic slice
    for kk, off in enumerate(tap_offsets):                   # static, fully unrolled
        rhs_ref[kk * c_in:(kk + 1) * c_in, :] = win[:, off:off + tile_l]
    # Single MXU contraction over KH*KW*C_in (instead of KH*KW latency-bound dots).
    acc = jnp.dot(w_ref[...], rhs_ref[...], preferred_element_type=jnp.float32)
    y = acc * scale_ref[...] + shift_ref[...]                 # f32 epilogue (v5e-safe)
    if apply_relu:
        y = jnp.maximum(y, 0.0)
    o_ref[...] = y.astype(o_ref.dtype)


def conv_bn_relu(x_nchw, weight_oihw, gamma, beta, running_mean, running_var,
                 *, bias=None, stride=1, pad=1, dilation=1, eps=1e-5,
                 has_bn=True, has_relu=True,
                 compute_dtype=jnp.bfloat16, lane_tile=1024):
    N, C_in, H, W = x_nchw.shape
    C_out, C_in_w, KH, KW = weight_oihw.shape
    assert C_in_w == C_in, "grouped conv not supported"   # TODO(synk): groups > 1
    d = dilation
    out_dtype = x_nchw.dtype

    H_pad, W_pad = H + 2 * pad, W + 2 * pad
    H_o1 = H_pad - d * (KH - 1)            # stride-1 output rows
    W_o1 = W_pad - d * (KW - 1)            # stride-1 output cols

    # ---- eval-mode BN folded into f32 per-channel scale/shift (applied in-kernel) ----
    if has_bn:
        scale = gamma * lax.rsqrt(running_var + eps)
        shift = beta - running_mean * scale
    else:
        scale = jnp.ones((C_out,), jnp.float32)
        shift = jnp.zeros((C_out,), jnp.float32)
    if bias is not None:
        shift = shift + scale * bias

    c_out_p = _round_up(C_out, 8)
    kkc = KH * KW * C_in
    # (O, I, KH, KW) -> (O, KH, KW, I) -> (C_out_p, KH*KW*C_in); weights stay unscaled
    # so the bf16 cast does not eat the BN scale's dynamic range.
    w_fused = jnp.transpose(weight_oihw, (0, 2, 3, 1)).reshape(C_out, kkc)
    w_fused = jnp.pad(w_fused, ((0, c_out_p - C_out), (0, 0))).astype(compute_dtype)
    scale_p = jnp.pad(scale.astype(jnp.float32), (0, c_out_p - C_out)).reshape(c_out_p, 1)
    shift_p = jnp.pad(shift.astype(jnp.float32), (0, c_out_p - C_out)).reshape(c_out_p, 1)

    # ---- pixel-axis tiling (lane-dense output tiles, multiples of 128) ----
    l_valid = H_o1 * W_pad                           # flat stride-1 outputs to produce
    l_out128 = _round_up(l_valid, 128)
    tile_l = min(_round_up(lane_tile, 128), l_out128)
    num_tiles = pl.cdiv(l_out128, tile_l)
    l_out = num_tiles * tile_l
    max_off = (KH - 1) * d * W_pad + (KW - 1) * d    # conv halo along the flat axis

    # ---- glue reduction: cast to compute dtype FIRST, then a SINGLE jnp.pad that
    #      covers both the spatial padding and the extra flat-length rows ----
    l_flat_needed = l_out + max_off
    H_flat = max(H_pad, -(-l_flat_needed // W_pad))
    l_flat = H_flat * W_pad
    x_flat = jnp.pad(x_nchw.astype(compute_dtype),
                     ((0, 0), (0, 0), (pad, pad + (H_flat - H_pad)), (pad, pad)))
    x_flat = x_flat.reshape(N, C_in, l_flat)

    tap_offsets = tuple(kh * d * W_pad + kw * d
                        for kh in range(KH) for kw in range(KW))

    kernel = functools.partial(_conv_bn_relu_kernel,
                               tap_offsets=tap_offsets, c_in=C_in,
                               tile_l=tile_l, halo=max_off, apply_relu=has_relu)

    flops = 2 * N * c_out_p * l_out * kkc
    bytes_accessed = (x_flat.size * x_flat.dtype.itemsize
                      + w_fused.size * w_fused.dtype.itemsize
                      + (scale_p.size + shift_p.size) * 4
                      + N * c_out_p * l_out * jnp.dtype(compute_dtype).itemsize)

    out_flat = pl.pallas_call(
        kernel,
        out_shape=jax.ShapeDtypeStruct((N, c_out_p, l_out), compute_dtype),
        grid=(N, num_tiles),
        in_specs=[
            # image: resident across the tile axis (index constant in t)
            pl.BlockSpec((None, C_in, l_flat), lambda n, t: (n, 0, 0)),
            pl.BlockSpec((c_out_p, kkc), lambda n, t: (0, 0)),     # fused weights
            pl.BlockSpec((c_out_p, 1), lambda n, t: (0, 0)),       # bn scale
            pl.BlockSpec((c_out_p, 1), lambda n, t: (0, 0)),       # bn shift
        ],
        out_specs=pl.BlockSpec((None, c_out_p, tile_l), lambda n, t: (n, 0, t)),
        scratch_shapes=[pltpu.VMEM((kkc, tile_l), compute_dtype)],
        compiler_params=pltpu.CompilerParams(
            dimension_semantics=("parallel", "parallel")),
        cost_estimate=pl.CostEstimate(flops=flops, transcendentals=0,
                                      bytes_accessed=bytes_accessed),
    )(x_flat, w_fused, scale_p, shift_p)

    # channels x flat-pixels -> NCHW; drop channel/lane padding and the wrap-around
    # columns; cast back to the input dtype (single fused slice/cast pass).
    y = out_flat[:, :C_out, :l_valid].reshape(N, C_out, H_o1, W_pad)
    y = y[:, :, :, :W_o1].astype(out_dtype)
    if stride > 1:
        # TODO(synk): compute only every stride-th row/col inside the kernel
        # (strided pl.ds loads) instead of dense stride-1 + subsampling.
        y = y[:, :, ::stride, ::stride]
    return y  # (N, C_out, H_out, W_out), dtype == x.dtype


if __name__ == "__main__":
    key = jax.random.PRNGKey(0)
    kx, kw = jax.random.split(key)

    # ConvBnRelu(in_planes=4, out_planes=8, ksize=3, stride=1, pad=1,
    #            has_bn=True, has_relu=True, has_bias=False), eval mode.
    N, C_in, H, W = 2, 4, 16, 16
    C_out, KS = 8, 3

    x = jax.random.normal(kx, (N, C_in, H, W), dtype=jnp.float32)
    weight = jax.random.normal(kw, (C_out, C_in, KS, KS), dtype=jnp.float32) * 0.1
    gamma = jnp.linspace(0.5, 1.5, C_out, dtype=jnp.float32)
    beta = jnp.linspace(-0.2, 0.2, C_out, dtype=jnp.float32)
    running_mean = jnp.linspace(-0.1, 0.1, C_out, dtype=jnp.float32)
    running_var = jnp.linspace(0.5, 2.0, C_out, dtype=jnp.float32)

    # pure-JAX f32 reference: conv -> BN(eval) -> ReLU
    conv = lax.conv_general_dilated(
        x, weight, window_strides=(1, 1), padding=((1, 1), (1, 1)),
        dimension_numbers=("NCHW", "OIHW", "NCHW"))
    ref_scale = gamma / jnp.sqrt(running_var + 1e-5)
    ref_shift = beta - running_mean * ref_scale
    ref = jnp.maximum(
        conv * ref_scale[None, :, None, None] + ref_shift[None, :, None, None], 0.0)

    # lane_tile=1024 -> single pixel tile per image; lane_tile=128 -> exercises the
    # multi-tile (dynamic-window, megacore-parallel) path used for large images.
    for lane_tile in (1024, 128):
        out = conv_bn_relu(x, weight, gamma, beta, running_mean, running_var,
                           stride=1, pad=1, lane_tile=lane_tile)
        out = jax.block_until_ready(out)
        assert out.shape == (N, C_out, H, W), out.shape
        max_err = float(jnp.max(jnp.abs(out.astype(jnp.float32) - ref)))
        # bf16 MXU operands + bf16 kernel writeback (f32 accumulation/epilogue)
        assert jnp.allclose(out.astype(jnp.float32), ref, atol=5e-2, rtol=5e-2), (
            lane_tile, max_err)

    print("KERNEL_OK")
</pallas_src>

<mosaic_0001>
module attributes {stable_mosaic.version = 11 : i64} {
  func.func @_conv_bn_relu_kernel(%arg0: i32, %arg1: i32, %arg2: memref<1x4x432xbf16, #tpu.memory_space<vmem>>, %arg3: memref<8x36xbf16, #tpu.memory_space<vmem>>, %arg4: memref<8x1xf32, #tpu.memory_space<vmem>>, %arg5: memref<8x1xf32, #tpu.memory_space<vmem>>, %arg6: memref<1x8x384xbf16, #tpu.memory_space<vmem>>, %arg7: memref<36x384xbf16, #tpu.memory_space<vmem>>) attributes {dimension_semantics = [#tpu.dimension_semantics<parallel>, #tpu.dimension_semantics<parallel>], iteration_bounds = array<i64: 2, 1>, scalar_prefetch = 0 : i64, scratch_operands = 1 : i64, tpu.core_type = #tpu.core_type<tc>, window_params = [{transform_indices = @transform_0, window_bounds = array<i64: 1, 4, 432>}, {pipeline_mode = #tpu.pipeline_mode<synchronous>, transform_indices = @transform_1, window_bounds = array<i64: 8, 36>}, {pipeline_mode = #tpu.pipeline_mode<synchronous>, transform_indices = @transform_2, window_bounds = array<i64: 8, 1>}, {pipeline_mode = #tpu.pipeline_mode<synchronous>, transform_indices = @transform_3, window_bounds = array<i64: 8, 1>}, {transform_indices = @transform_4, window_bounds = array<i64: 1, 8, 384>}]} {
    %c384_i32 = arith.constant 384 : i32
    %0 = arith.muli %arg1, %c384_i32 : i32
    %1 = tpu.assume_multiple %0, 128 : i32
    %c0 = arith.constant 0 : index
    %c0_0 = arith.constant 0 : index
    %2 = arith.index_cast %1 : i32 to index
    %3 = vector.load %arg2[%c0, %c0_0, %2] : memref<1x4x432xbf16, #tpu.memory_space<vmem>>, vector<1x4x422xbf16>
    %4 = vector.shape_cast %3 : vector<1x4x422xbf16> to vector<4x422xbf16>
    %5 = vector.extract_strided_slice %4 {offsets = [0, 0], sizes = [4, 384], strides = [1, 1]} : vector<4x422xbf16> to vector<4x384xbf16>
    %c0_1 = arith.constant 0 : index
    %c0_2 = arith.constant 0 : index
    %6 = vector.load %arg7[%c0_1, %c0_2] : memref<36x384xbf16, #tpu.memory_space<vmem>>, vector<4x384xbf16>
    tpu.vector_store %arg7[%c0_1, %c0_2], %5 {strides = array<i32>} : memref<36x384xbf16, #tpu.memory_space<vmem>>, vector<4x384xbf16>,
    %7 = vector.extract_strided_slice %4 {offsets = [0, 1], sizes = [4, 384], strides = [1, 1]} : vector<4x422xbf16> to vector<4x384xbf16>
    %c4 = arith.constant 4 : index
    %c0_3 = arith.constant 0 : index
    %8 = vector.load %arg7[%c4, %c0_3] : memref<36x384xbf16, #tpu.memory_space<vmem>>, vector<4x384xbf16>
    tpu.vector_store %arg7[%c4, %c0_3], %7 {strides = array<i32>} : memref<36x384xbf16, #tpu.memory_space<vmem>>, vector<4x384xbf16>,
    %9 = vector.extract_strided_slice %4 {offsets = [0, 2], sizes = [4, 384], strides = [1, 1]} : vector<4x422xbf16> to vector<4x384xbf16>
    %c8 = arith.constant 8 : index
    %c0_4 = arith.constant 0 : index
    %10 = vector.load %arg7[%c8, %c0_4] : memref<36x384xbf16, #tpu.memory_space<vmem>>, vector<4x384xbf16>
    tpu.vector_store %arg7[%c8, %c0_4], %9 {strides = array<i32>} : memref<36x384xbf16, #tpu.memory_space<vmem>>, vector<4x384xbf16>,
    %11 = vector.extract_strided_slice %4 {offsets = [0, 18], sizes = [4, 384], strides = [1, 1]} : vector<4x422xbf16> to vector<4x384xbf16>
    %c12 = arith.constant 12 : index
    %c0_5 = arith.constant 0 : index
    %12 = vector.load %arg7[%c12, %c0_5] : memref<36x384xbf16, #tpu.memory_space<vmem>>, vector<4x384xbf16>
    tpu.vector_store %arg7[%c12, %c0_5], %11 {strides = array<i32>} : memref<36x384xbf16, #tpu.memory_space<vmem>>, vector<4x384xbf16>,
    %13 = vector.extract_strided_slice %4 {offsets = [0, 19], sizes = [4, 384], strides = [1, 1]} : vector<4x422xbf16> to vector<4x384xbf16>
    %c16 = arith.constant 16 : index
    %c0_6 = arith.constant 0 : index
    %14 = vector.load %arg7[%c16, %c0_6] : memref<36x384xbf16, #tpu.memory_space<vmem>>, vector<4x384xbf16>
    tpu.vector_store %arg7[%c16, %c0_6], %13 {strides = array<i32>} : memref<36x384xbf16, #tpu.memory_space<vmem>>, vector<4x384xbf16>,
    %15 = vector.extract_strided_slice %4 {offsets = [0, 20], sizes = [4, 384], strides = [1, 1]} : vector<4x422xbf16> to vector<4x384xbf16>
    %c20 = arith.constant 20 : index
    %c0_7 = arith.constant 0 : index
    %16 = vector.load %arg7[%c20, %c0_7] : memref<36x384xbf16, #tpu.memory_space<vmem>>, vector<4x384xbf16>
    tpu.vector_store %arg7[%c20, %c0_7], %15 {strides = array<i32>} : memref<36x384xbf16, #tpu.memory_space<vmem>>, vector<4x384xbf16>,
    %17 = vector.extract_strided_slice %4 {offsets = [0, 36], sizes = [4, 384], strides = [1, 1]} : vector<4x422xbf16> to vector<4x384xbf16>
    %c24 = arith.constant 24 : index
    %c0_8 = arith.constant 0 : index
    %18 = vector.load %arg7[%c24, %c0_8] : memref<36x384xbf16, #tpu.memory_space<vmem>>, vector<4x384xbf16>
    tpu.vector_store %arg7[%c24, %c0_8], %17 {strides = array<i32>} : memref<36x384xbf16, #tpu.memory_space<vmem>>, vector<4x384xbf16>,
    %19 = vector.extract_strided_slice %4 {offsets = [0, 37], sizes = [4, 384], strides = [1, 1]} : vector<4x422xbf16> to vector<4x384xbf16>
    %c28 = arith.constant 28 : index
    %c0_9 = arith.constant 0 : index
    %20 = vector.load %arg7[%c28, %c0_9] : memref<36x384xbf16, #tpu.memory_space<vmem>>, vector<4x384xbf16>
    tpu.vector_store %arg7[%c28, %c0_9], %19 {strides = array<i32>} : memref<36x384xbf16, #tpu.memory_space<vmem>>, vector<4x384xbf16>,
    %21 = vector.extract_strided_slice %4 {offsets = [0, 38], sizes = [4, 384], strides = [1, 1]} : vector<4x422xbf16> to vector<4x384xbf16>
    %c32 = arith.constant 32 : index
    %c0_10 = arith.constant 0 : index
    %22 = vector.load %arg7[%c32, %c0_10] : memref<36x384xbf16, #tpu.memory_space<vmem>>, vector<4x384xbf16>
    tpu.vector_store %arg7[%c32, %c0_10], %21 {strides = array<i32>} : memref<36x384xbf16, #tpu.memory_space<vmem>>, vector<4x384xbf16>,
    %c0_11 = arith.constant 0 : index
    %c0_12 = arith.constant 0 : index
    %23 = vector.load %arg3[%c0_11, %c0_12] : memref<8x36xbf16, #tpu.memory_space<vmem>>, vector<8x36xbf16>
    %c0_13 = arith.constant 0 : index
    %c0_14 = arith.constant 0 : index
    %24 = vector.load %arg7[%c0_13, %c0_14] : memref<36x384xbf16, #tpu.memory_space<vmem>>, vector<36x384xbf16>
    %cst = arith.constant dense<0.000000e+00> : vector<8x384xf32>
    %25 = tpu.matmul %23, %24, %cst {dimension_numbers = #tpu.dot_dimension_numbers<[1], [0], [0], [1], [0, 0, 1, 1], [], []>} : vector<8x36xbf16>, vector<36x384xbf16>, vector<8x384xf32> -> vector<8x384xf32>
    %c0_15 = arith.constant 0 : index
    %c0_16 = arith.constant 0 : index
    %26 = vector.load %arg4[%c0_15, %c0_16] : memref<8x1xf32, #tpu.memory_space<vmem>>, vector<8x1xf32>
    %27 = vector.broadcast %26 : vector<8x1xf32> to vector<8x384xf32>
    %28 = arith.mulf %25, %27 : vector<8x384xf32>
    %c0_17 = arith.constant 0 : index
    %c0_18 = arith.constant 0 : index
    %29 = vector.load %arg5[%c0_17, %c0_18] : memref<8x1xf32, #tpu.memory_space<vmem>>, vector<8x1xf32>
    %30 = vector.broadcast %29 : vector<8x1xf32> to vector<8x384xf32>
    %31 = arith.addf %28, %30 : vector<8x384xf32>
    %cst_19 = arith.constant 0.000000e+00 : f32
    %32 = vector.broadcast %cst_19 : f32 to vector<8x384xf32>
    %33 = arith.maximumf %31, %32 : vector<8x384xf32>
    %34 = arith.truncf %33 : vector<8x384xf32> to vector<8x384xbf16>
    %c0_20 = arith.constant 0 : index
    %c0_21 = arith.constant 0 : index
    %c0_22 = arith.constant 0 : index
    %35 = vector.load %arg6[%c0_20, %c0_21, %c0_22] : memref<1x8x384xbf16, #tpu.memory_space<vmem>>, vector<1x8x384xbf16>
    %36 = vector.shape_cast %35 : vector<1x8x384xbf16> to vector<8x384xbf16>
    %37 = vector.shape_cast %34 : vector<8x384xbf16> to vector<1x8x384xbf16>
    tpu.vector_store %arg6[%c0_20, %c0_21, %c0_22], %37 {strides = array<i32>} : memref<1x8x384xbf16, #tpu.memory_space<vmem>>, vector<1x8x384xbf16>,
    return
  }
  func.func @transform_0(%arg0: i32, %arg1: i32) -> (i32, i32, i32) {
    %c0_i32 = arith.constant 0 : i32
    %c0_i32_0 = arith.constant 0 : i32
    %c0_i32_1 = arith.constant 0 : i32
    return %arg0, %c0_i32, %c0_i32_0 : i32, i32, i32
  }
  func.func @transform_1(%arg0: i32, %arg1: i32) -> (i32, i32) {
    %c0_i32 = arith.constant 0 : i32
    %c0_i32_0 = arith.constant 0 : i32
    %c0_i32_1 = arith.constant 0 : i32
    return %c0_i32, %c0_i32_0 : i32, i32
  }
  func.func @transform_2(%arg0: i32, %arg1: i32) -> (i32, i32) {
    %c0_i32 = arith.constant 0 : i32
    %c0_i32_0 = arith.constant 0 : i32
    %c0_i32_1 = arith.constant 0 : i32
    return %c0_i32, %c0_i32_0 : i32, i32
  }
  func.func @transform_3(%arg0: i32, %arg1: i32) -> (i32, i32) {
    %c0_i32 = arith.constant 0 : i32
    %c0_i32_0 = arith.constant 0 : i32
    %c0_i32_1 = arith.constant 0 : i32
    return %c0_i32, %c0_i32_0 : i32, i32
  }
  func.func @transform_4(%arg0: i32, %arg1: i32) -> (i32, i32, i32) {
    %c0_i32 = arith.constant 0 : i32
    %c0_i32_0 = arith.constant 0 : i32
    return %arg0, %c0_i32, %arg1 : i32, i32, i32
  }
}

</mosaic_0001>

<llo_original>
// kernel: tpu_custom_call.1
$region0: #{tpu_custom_call.1}
  #allocation0 [shape = 'u32[]', space=smem, size = 0x4, offset = 0x4, fixed_abs, tag = 'smem constant byte address 0x4 - core index']
  #allocation1 [shape = 'u32[144,128]{1,0:T(1,128)}', space=vmem, size = 0x12000, scoped, tag = 'internal scratch']
  #allocation2 [shape = 'bf16[36,384]{1,0:T(8,128)(2,1)}', space=vmem, size = 0x7800, scoped, tag = 'scratch operand']
  %s0 = inlined_call_operand.vmem [shape: bf16[2,4,432], index: 0, kind: input, shape index: {}]
  %s1 = inlined_call_operand.hbm [shape: bf16[8,36], index: 1, kind: input, shape index: {}]
  %s2 = inlined_call_operand.vmem [shape: f32[8,1], index: 2, kind: input, shape index: {}]
  %s3 = inlined_call_operand.vmem [shape: f32[8,1], index: 3, kind: input, shape index: {}]
  %s4 = inlined_call_operand.hbm [shape: bf16[2,8,384], index: 4, kind: output, shape index: {}]
  %s5 = sld [smem:[#allocation0]]
  $region53: #{tpu_custom_call.1} parent=0
    _
  %s7 = ssub.s32 1, %s5
  %s8 = scalar_select 0, %s7, %s5
  $region1: #{tpu_custom_call.1} parent=0
    #allocation3 [shape = 'u8[2048]{0}', space=vmem, size = 0x800, scoped, tag = 'input window, operand 1, single buffered']
    #allocation4 [shape = 's32[2]{0}', space=sflag, size = 0x8, scoped, tag = 'scoped memory for tpu_custom_call.1']
    #allocation5 [shape = 's32[2]{0}', space=sflag, size = 0x8, scoped, tag = 'scoped memory for tpu_custom_call.1']
    #allocation6 [shape = 'u8[12288]{0}', space=vmem, size = 0x3000, scoped, tag = 'output window, operand 0']
    %9 = vsyncpa [#allocation4], 0
    %10 = vsyncpa [#allocation5], 0
    %s11 = scalar_lea.sflag [#allocation5], 1
    %12 = vsyncpa %s11, 0
    loop: start=0, step=1, limit=4
    $region2: #{tpu_custom_call.1} parent=1 // loop_pre_header
      _
    $region3: #{tpu_custom_call.1} parent=1 // loop_header
      %s14 = sphi 0, %s18
      %p15 = scmp.ge.s32.totalorder %s14, 4
      %s21 = sphi 0, %s33
      %s22 = sphi 0, %s29
      %s23 = sphi 0, %s21
      %s24 = sphi 0, %s22
      %s25 = sphi 0, %s23
      %s26 = sphi 0, %s24
      %s36 = sphi 0, %s38
      %s39 = sphi 0, %s36
      %s40 = sphi 0, %s39
      %s56 = sphi 0, %s40
      %s60 = sphi 0, %s60
      %s62 = sphi 0, %s60
      %s63 = sphi 0, %s62
      %s77 = sphi 0, %s63
      %s81 = sphi 0, %s81
      %s83 = sphi 0, %s81
      %s84 = sphi 0, %s83
      %s98 = sphi 0, %s84
      %s102 = sphi 0, %s102
      %s104 = sphi 0, %s102
      %s105 = sphi 0, %s104
      %s119 = sphi 0, %s105
      %s127 = sphi 0, %s129
      %s130 = sphi 0, %s127
      %s131 = sphi 0, %s130
      %s147 = sphi 0, %s131
    $region4: #{tpu_custom_call.1} parent=1 // loop_header_branch
      %17 = sbr.rel (%p15) target = $region8
    $region5: #{tpu_custom_call.1} parent=1 // loop_body
      %s19 = ssub.s32 %s14, 1
      %s20 = ssub.s32 %s14, 2
      %s27 = sadd.s32 1, %s22
      %p28 = scmp.ge.s32.totalorder %s27, 1
      %s29 = scalar_select %p28, 0, %s27
      %s30 = sadd.s32 1, %s21
      %s31 = scalar_select %p28, %s30, %s21
      %p32 = scmp.ge.s32.totalorder %s31, 2
      %s33 = scalar_select %p32, 0, %s31
      %s34 = ssub.s32 %s21, %s33
      %p35 = scmp.eq.s32.totalorder %s34, 0
      %s37 = sadd.s32 %s36, 1
      %s38 = scalar_select %p35, %s36, %s37
      %p41 = pneg %p35
      %p42 = scmp.eq.s32.totalorder %s14, 1
      %p43 = por %p41, %p42
      %p44 = scmp.ne.s32.totalorder %s36, %s39
      %p45 = scmp.eq.s32.totalorder %s14, 0
      %p46 = por %p44, %p45
      %p47 = scmp.ne.s32.totalorder %s36, %s39
      %p48 = scmp.eq.s32.totalorder %s19, 1
      %p49 = por %p47, %p48
      %p50 = scmp.ne.s32.totalorder %s39, %s40
      %p51 = scmp.eq.s32.totalorder %s19, 0
      %p52 = por %p50, %p51
      %p53 = scmp.ne.s32.totalorder %s39, %s40
      %p54 = scmp.eq.s32.totalorder %s20, 1
      %p55 = por %p53, %p54
      %p57 = scmp.ne.s32.totalorder %s40, %s56
      %p58 = scmp.eq.s32.totalorder %s20, 0
      %p59 = por %p57, %p58
      %s61 = sadd.s32 %s60, 1
      %p64 = scmp.eq.s32.totalorder %s14, 1
      %p65 = scmp.ne.s32.totalorder %s60, %s62
      %p66 = scmp.eq.s32.totalorder %s14, 0
      %p67 = por %p65, %p66
      %p68 = scmp.ne.s32.totalorder %s60, %s62
      %p69 = scmp.eq.s32.totalorder %s19, 1
      %p70 = por %p68, %p69
      %p71 = scmp.ne.s32.totalorder %s62, %s63
      %p72 = scmp.eq.s32.totalorder %s19, 0
      %p73 = por %p71, %p72
      %p74 = scmp.ne.s32.totalorder %s62, %s63
      %p75 = scmp.eq.s32.totalorder %s20, 1
      %p76 = por %p74, %p75
      %p78 = scmp.ne.s32.totalorder %s63, %s77
      %p79 = scmp.eq.s32.totalorder %s20, 0
      %p80 = por %p78, %p79
      %s82 = sadd.s32 %s81, 1
      %p85 = scmp.eq.s32.totalorder %s14, 1
      %p86 = scmp.ne.s32.totalorder %s81, %s83
      %p87 = scmp.eq.s32.totalorder %s14, 0
      %p88 = por %p86, %p87
      %p89 = scmp.ne.s32.totalorder %s81, %s83
      %p90 = scmp.eq.s32.totalorder %s19, 1
      %p91 = por %p89, %p90
      %p92 = scmp.ne.s32.totalorder %s83, %s84
      %p93 = scmp.eq.s32.totalorder %s19, 0
      %p94 = por %p92, %p93
      %p95 = scmp.ne.s32.totalorder %s83, %s84
      %p96 = scmp.eq.s32.totalorder %s20, 1
      %p97 = por %p95, %p96
      %p99 = scmp.ne.s32.totalorder %s84, %s98
      %p100 = scmp.eq.s32.totalorder %s20, 0
      %p101 = por %p99, %p100
      %s103 = sadd.s32 %s102, 1
      %p106 = scmp.eq.s32.totalorder %s14, 1
      %p107 = scmp.ne.s32.totalorder %s102, %s104
      %p108 = scmp.eq.s32.totalorder %s14, 0
      %p109 = por %p107, %p108
      %p110 = scmp.ne.s32.totalorder %s102, %s104
      %p111 = scmp.eq.s32.totalorder %s19, 1
      %p112 = por %p110, %p111
      %p113 = scmp.ne.s32.totalorder %s104, %s105
      %p114 = scmp.eq.s32.totalorder %s19, 0
      %p115 = por %p113, %p114
      %p116 = scmp.ne.s32.totalorder %s104, %s105
      %p117 = scmp.eq.s32.totalorder %s20, 1
      %p118 = por %p116, %p117
      %p120 = scmp.ne.s32.totalorder %s105, %s119
      %p121 = scmp.eq.s32.totalorder %s20, 0
      %p122 = por %p120, %p121
      %s123 = ssub.s32 %s21, %s33
      %s124 = ssub.s32 %s22, %s29
      %s125 = sor.u32 %s123, %s124
      %p126 = scmp.eq.s32.totalorder %s125, 0
      %s128 = sadd.s32 %s127, 1
      %s129 = scalar_select %p126, %s127, %s128
      %p132 = pneg %p126
      %p133 = scmp.eq.s32.totalorder %s14, 1
      %p134 = por %p132, %p133
      %p135 = scmp.ne.s32.totalorder %s127, %s130
      %p136 = scmp.eq.s32.totalorder %s14, 0
      %p137 = por %p135, %p136
      %p138 = scmp.ne.s32.totalorder %s127, %s130
      %p139 = scmp.eq.s32.totalorder %s19, 1
      %p140 = por %p138, %p139
      %p141 = scmp.ne.s32.totalorder %s130, %s131
      %p142 = scmp.eq.s32.totalorder %s19, 0
      %p143 = por %p141, %p142
      %p144 = scmp.ne.s32.totalorder %s130, %s131
      %p145 = scmp.eq.s32.totalorder %s20, 1
      %p146 = por %p144, %p145
      %p148 = scmp.ne.s32.totalorder %s131, %s147
      %p149 = scmp.eq.s32.totalorder %s20, 0
      %p150 = por %p148, %p149
      %p151 = scmp.le.s32.totalorder 1, %s14
      %p152 = scmp.lt.s32.totalorder %s14, 3
      %p153 = pnand %p151, %p152
      %p154 = pneg %p153
      // Predicated region
      $region9: #{tpu_custom_call.1} parent=5 // pred_check
        _
      $region10: #{tpu_custom_call.1} parent=5 // pred_check_branch
        %156 = sbr.rel (%p153) target = $region12
      $region11: #{tpu_custom_call.1} parent=5 // pred_region
        %s157 = ssub.s32 %s14, 1
        // Predicated region
        $region13: #{tpu_custom_call.1} parent=11 // pred_check
          %p158 = pneg %p73
        $region14: #{tpu_custom_call.1} parent=11 // pred_check_branch
          %160 = sbr.rel (%p158) target = $region16
        $region15: #{tpu_custom_call.1} parent=11 // pred_region
          %s162 = ssub.s32 64, 64
          %163 = vsyncadd [#allocation4], %s162
          %s165 = sshll.u32 [#allocation3], 4
          %s166 = int_to_ptr.vmem [resolvable:$true] %s165
          %168 = dma.hbm_to_vmem [thread:$0]  %s1, 64, %s166, [#allocation4]
        $region16: #{tpu_custom_call.1} parent=11 // pred_fallthru
          _
        // Predicated region
        $region17: #{tpu_custom_call.1} parent=11 // pred_check
          %p169 = pneg %p94
        $region18: #{tpu_custom_call.1} parent=11 // pred_check_branch
          %171 = sbr.rel (%p169) target = $region20
        $region19: #{tpu_custom_call.1} parent=11 // pred_region
          _
        $region20: #{tpu_custom_call.1} parent=11 // pred_fallthru
          _
        // Predicated region
        $region21: #{tpu_custom_call.1} parent=11 // pred_check
          %p172 = pneg %p115
        $region22: #{tpu_custom_call.1} parent=11 // pred_check_branch
          %174 = sbr.rel (%p172) target = $region24
        $region23: #{tpu_custom_call.1} parent=11 // pred_region
          _
        $region24: #{tpu_custom_call.1} parent=11 // pred_fallthru
          _
      $region12: #{tpu_custom_call.1} parent=5 // pred_fallthru
        _
      %p175 = scmp.lt.s32.totalorder %s14, 2
      // Predicated region
      $region25: #{tpu_custom_call.1} parent=5 // pred_check
        %p176 = pneg %p175
      $region26: #{tpu_custom_call.1} parent=5 // pred_check_branch
        %178 = sbr.rel (%p176) target = $region28
      $region27: #{tpu_custom_call.1} parent=5 // pred_region
        // Predicated region
        $region29: #{tpu_custom_call.1} parent=27 // pred_check
          %p179 = pneg %p46
        $region30: #{tpu_custom_call.1} parent=27 // pred_check_branch
          %181 = sbr.rel (%p179) target = $region32
        $region31: #{tpu_custom_call.1} parent=27 // pred_region
          %p182 = scmp.lt.s32.totalorder %s21, 1
          %s183 = scalar_select %p182, %s21, 1
          %s184 = smul.addr %s183, 4
          %s185 = smul.addr %s184, 2
          %s186 = scalar_lea.vmem %s0, %s185
        $region32: #{tpu_custom_call.1} parent=27 // pred_fallthru
          _
      $region28: #{tpu_custom_call.1} parent=5 // pred_fallthru
        _
      %p187 = scmp.le.s32.totalorder 1, %s14
      %p188 = scmp.lt.s32.totalorder %s14, 3
      %p189 = pnand %p187, %p188
      %p190 = pneg %p189
      // Predicated region
      $region33: #{tpu_custom_call.1} parent=5 // pred_check
        _
      $region34: #{tpu_custom_call.1} parent=5 // pred_check_branch
        %192 = sbr.rel (%p189) target = $region36
      $region35: #{tpu_custom_call.1} parent=5 // pred_region
        %s193 = ssub.s32 %s14, 1
        // Predicated region
        $region37: #{tpu_custom_call.1} parent=35 // pred_check
          %p194 = pneg %p73
        $region38: #{tpu_custom_call.1} parent=35 // pred_check_branch
          %196 = sbr.rel (%p194) target = $region40
        $region39: #{tpu_custom_call.1} parent=35 // pred_region
          %197 = dma.done [#allocation4], 64
        $region40: #{tpu_custom_call.1} parent=35 // pred_fallthru
          _
        %p198 = scmp.lt.s32.totalorder %s23, 1
        %s199 = scalar_select %p198, %s23, 1
        %s200 = smul.addr %s199, 4
        %s201 = smul.addr %s200, 2
        %s202 = scalar_lea.vmem %s0, %s201
        %p203 = pneg %p52
        %p204 = pneg %p49
        %p205 = pneg %p73
        %p206 = pneg %p70
        %p207 = pneg %p94
        %p208 = pneg %p91
        %p209 = pneg %p115
        %p210 = pneg %p112
        %p211 = pneg %p143
        %p212 = pneg %p140
        %s213 = sand.u32 %s130, 1
        %s214 = scalar_lea.sflag [#allocation5], %s213
        %s215 = sand.u32 %s130, 1
        %s216 = smul.addr %s215, 12
        %s217 = scalar_lea.vmem [#allocation6], %s216
        %p218 = scmp.lt.s32.totalorder %s23, 1
        %s219 = scalar_select %p218, %s23, 1
        %s220 = smul.addr %s219, 4
        %s221 = smul.addr %s220, 2
        %s222 = scalar_lea.vmem %s0, %s221
        %s223 = smul.u32 3, %s24
        %s225 = smul.u32 %s24, 384
        %s226 = sshra.s32 %s225, 7
        %s227 = sand.u32 %s225, 127
        %s228 = smul.addr %s226, 2
        %s229 = scalar_lea.vmem %s222, %s228
        %v230 = vld [vmem:[%s229] sm:$0xff]
        %v232 = vcombine.high %v230, %v230
        %v234 = vunpack.c.l.s4 1983009808
        %v235 = vunpack.c.0.s8 %v234
        %v236 = vlaneseq
        %v237 = vshrl.u32 %v236, 7
        %v238 = vsub.s32 %v235, %v237
        %v239 = vrot.slane %v230, %v238
        %v241 = vunpack.c.l.s4 1983009808
        %v242 = vunpack.c.0.s8 %v241
        %v243 = vlaneseq
        %v244 = vshrl.u32 %v243, 7
        %v245 = vsub.s32 %v242, %v244
        %v246 = vrot.slane %v232, %v245
        %249 = vst [vmem:[#allocation2] sm:$0x33] %v239
        %250 = vst [vmem:[#allocation2 + $0x8] sm:$0x3] %v246
        %v251 = vcombine.low %v230, %v230
        %v253 = vunpack.c.l.s4 1983009808
        %v254 = vunpack.c.0.s8 %v253
        %v255 = vlaneseq
        %v256 = vshrl.u32 %v255, 7
        %v257 = vsub.s32 %v254, %v256
        %v258 = vrot.slane %v251, %v257
        %259 = vrot.lane.b32.xlu0 %v258, 127
        %v260 = vpop.permute.xlu0 %259
        %261 = vrot.lane.b32.xlu0 %v239, 127
        %v262 = vpop.permute.xlu0 %261
        %v263 = vrot.slane %v260, 4
        %v264 = vrot.slane %v262, 4
        %vm265 = vcmask 1043456
        %v266 = vsel %vm265, %v263, %v264
        %vm267 = vcmask 1039360
        %v268 = vsel %vm267, %v260, %v266
        %v269 = vsel %vm267, %v262, %v264
        %272 = vst [vmem:[#allocation2] sm:$0xcc] %v268
        %273 = vst [vmem:[#allocation2 + $0x8] sm:$0xc] %v269
        %274 = vrot.lane.b32.xlu0 %v239, 126
        %v275 = vpop.permute.xlu0 %274
        %276 = vrot.lane.b32.xlu0 %v246, 126
        %v277 = vpop.permute.xlu0 %276
        %v278 = vrot.slane %v275, 4
        %v279 = vrot.slane %v277, 4
        %v280 = vsel %vm265, %v278, %v279
        %vm281 = vcmask 1031168
        %v282 = vsel %vm281, %v275, %v280
        %v283 = vsel %vm281, %v277, %v279
        %286 = vst [vmem:[#allocation2 + $0xc] sm:$0x33] %v282
        %287 = vst [vmem:[#allocation2 + $0x14] sm:$0x3] %v283
        %288 = vrot.lane.b32.xlu0 %v258, 110
        %v289 = vpop.permute.xlu0 %288
        %290 = vrot.lane.b32.xlu0 %v239, 110
        %v291 = vpop.permute.xlu0 %290
        %v292 = vrot.slane %v289, 4
        %v293 = vrot.slane %v291, 4
        %v294 = vsel %vm265, %v292, %v293
        %vm295 = vcmask 900096
        %v296 = vsel %vm295, %v289, %v294
        %v297 = vsel %vm295, %v291, %v293
        %300 = vst [vmem:[#allocation2 + $0xc] sm:$0xcc] %v296
        %301 = vst [vmem:[#allocation2 + $0x14] sm:$0xc] %v297
        %302 = vrot.lane.b32.xlu0 %v239, 109
        %v303 = vpop.permute.xlu0 %302
        %304 = vrot.lane.b32.xlu0 %v246, 109
        %v305 = vpop.permute.xlu0 %304
        %v306 = vrot.slane %v303, 4
        %v307 = vrot.slane %v305, 4
        %v308 = vsel %vm265, %v306, %v307
        %vm309 = vcmask 891904
        %v310 = vsel %vm309, %v303, %v308
        %v311 = vsel %vm309, %v305, %v307
        %314 = vst [vmem:[#allocation2 + $0x18] sm:$0x33] %v310
        %315 = vst [vmem:[#allocation2 + $0x20] sm:$0x3] %v311
        %316 = vrot.lane.b32.xlu0 %v258, 108
        %v317 = vpop.permute.xlu0 %316
        %318 = vrot.lane.b32.xlu0 %v239, 108
        %v319 = vpop.permute.xlu0 %318
        %v320 = vrot.slane %v317, 4
        %v321 = vrot.slane %v319, 4
        %v322 = vsel %vm265, %v320, %v321
        %vm323 = vcmask 883712
        %v324 = vsel %vm323, %v317, %v322
        %v325 = vsel %vm323, %v319, %v321
        %328 = vst [vmem:[#allocation2 + $0x18] sm:$0xcc] %v324
        %329 = vst [vmem:[#allocation2 + $0x20] sm:$0xc] %v325
        %330 = vrot.lane.b32.xlu0 %v239, 92
        %v331 = vpop.permute.xlu0 %330
        %332 = vrot.lane.b32.xlu0 %v246, 92
        %v333 = vpop.permute.xlu0 %332
        %v334 = vrot.slane %v331, 4
        %v335 = vrot.slane %v333, 4
        %v336 = vsel %vm265, %v334, %v335
        %vm337 = vcmask 752640
        %v338 = vsel %vm337, %v331, %v336
        %v339 = vsel %vm337, %v333, %v335
        %342 = vst [vmem:[#allocation2 + $0x24] sm:$0x33] %v338
        %343 = vst [vmem:[#allocation2 + $0x2c] sm:$0x3] %v339
        %344 = vrot.lane.b32.xlu0 %v258, 91
        %v345 = vpop.permute.xlu0 %344
        %346 = vrot.lane.b32.xlu0 %v239, 91
        %v347 = vpop.permute.xlu0 %346
        %v348 = vrot.slane %v345, 4
        %v349 = vrot.slane %v347, 4
        %v350 = vsel %vm265, %v348, %v349
        %vm351 = vcmask 744448
        %v352 = vsel %vm351, %v345, %v350
        %v353 = vsel %vm351, %v347, %v349
        %356 = vst [vmem:[#allocation2 + $0x24] sm:$0xcc] %v352
        %357 = vst [vmem:[#allocation2 + $0x2c] sm:$0xc] %v353
        %358 = vrot.lane.b32.xlu0 %v239, 90
        %v359 = vpop.permute.xlu0 %358
        %360 = vrot.lane.b32.xlu0 %v246, 90
        %v361 = vpop.permute.xlu0 %360
        %v362 = vrot.slane %v359, 4
        %v363 = vrot.slane %v361, 4
        %v364 = vsel %vm265, %v362, %v363
        %vm365 = vcmask 736256
        %v366 = vsel %vm365, %v359, %v364
        %v367 = vsel %vm365, %v361, %v363
        %370 = vst [vmem:[#allocation2 + $0x30] sm:$0x33] %v366
        %371 = vst [vmem:[#allocation2 + $0x38] sm:$0x3] %v367
        %v372 = vld [vmem:[#allocation3] sm:$0xf]
        %v373 = vld [vmem:[#allocation2] sm:$0xff]
        %v374 = vld [vmem:[#allocation2 + $0x8] sm:$0xf]
        %v375 = vld [vmem:[#allocation2 + $0xc] sm:$0xff]
        %v376 = vld [vmem:[#allocation2 + $0x14] sm:$0xf]
        %v377 = vld [vmem:[#allocation2 + $0x18] sm:$0xff]
        %v378 = vld [vmem:[#allocation2 + $0x20] sm:$0xf]
        %v379 = vld [vmem:[#allocation2 + $0x24] sm:$0xff]
        %v380 = vld [vmem:[#allocation2 + $0x2c] sm:$0xf]
        %v381 = vld [vmem:[#allocation2 + $0x30] sm:$0x33]
        %v382 = vld [vmem:[#allocation2 + $0x38] sm:$0x3]
        %v393 = vunpack.c.l.b16 %v373
        %v394 = vunpack.c.h.b16 %v373
        %v395 = vunpack.c.l.b16 %v374
        %v396 = vunpack.c.l.b16 %v375
        %v397 = vunpack.c.h.b16 %v375
        %v398 = vunpack.c.l.b16 %v376
        %v399 = vunpack.c.l.b16 %v377
        %v400 = vunpack.c.h.b16 %v377
        %v401 = vunpack.c.l.b16 %v378
        %v402 = vunpack.c.l.b16 %v379
        %v403 = vunpack.c.h.b16 %v379
        %v404 = vunpack.c.l.b16 %v380
        %v405 = vunpack.c.l.b16 %v381
        %v406 = vunpack.c.h.b16 %v381
        %v407 = vunpack.c.l.b16 %v382
        %v408 = vpack.c.b16 %v396, %v393
        %v409 = vpack.c.b16 %v397, %v394
        %v410 = vpack.c.b16 %v398, %v395
        %v411 = vpack.c.b16 %v402, %v399
        %v412 = vpack.c.b16 %v403, %v400
        %v413 = vpack.c.b16 %v404, %v401
        %v414 = vpack.c.b16 %v405, %v405
        %v415 = vpack.c.b16 %v406, %v406
        %v416 = vpack.c.b16 %v407, %v407
        %vm423 = vcmask 293888
        %v425 = vsel %vm423, %v372, 0
        %vm427 = vcmask 1041408
        %v429 = vsel %vm427, %v414, 0
        %v432 = vsel %vm427, %v415, 0
        %v435 = vsel %vm427, %v416, 0
        %437 = vmatprep.subr.bf16.mxu0 0
        %438 = vmatpush1.bf16.msra.mxu0 0
        %439 = vmatprep.subr.bf16.mxu0 0
        %440 = vmatpush1.bf16.msra.mxu0 0
        %441 = vmatprep.subr.bf16.mxu0 0
        %442 = vmatpush1.bf16.msra.mxu0 0
        %443 = vmatprep.subr.bf16.mxu0 0
        %444 = vmatpush1.bf16.msra.mxu0 0
        %445 = vmatprep.subr.bf16.mxu0 0
        %446 = vmatpush1.bf16.msra.mxu0 0
        %447 = vmatprep.subr.bf16.mxu0 %v432
        %448 = vmatpush1.bf16.msra.mxu0 %v429
        %449 = vmatprep.subr.bf16.mxu0 %v412
        %450 = vmatpush1.bf16.msra.mxu0 %v411
        %451 = vmatprep.subr.bf16.mxu0 %v409
        %452 = vmatpush1.bf16.msra.mxu0 %v408
        %453 = vmatprep.subr.bf16.mxu0 0
        %454 = vmatpush2.bf16.msra.mxu0 0
        %455 = vmatprep.subr.bf16.mxu0 0
        %456 = vmatpush2.bf16.msra.mxu0 0
        %457 = vmatprep.subr.bf16.mxu0 0
        %458 = vmatpush2.bf16.msra.mxu0 0
        %459 = vmatprep.subr.bf16.mxu0 0
        %460 = vmatpush2.bf16.msra.mxu0 0
        %461 = vmatprep.subr.bf16.mxu0 0
        %462 = vmatpush2.bf16.msra.mxu0 0
        %463 = vmatprep.subr.bf16.mxu0 0
        %464 = vmatpush2.bf16.msra.mxu0 0
        %465 = vmatprep.subr.bf16.mxu0 0
        %466 = vmatpush2.bf16.msra.mxu0 0
        %467 = vmatprep.subr.bf16.mxu0 0
        %468 = vmatpush2.bf16.msra.mxu0 0
        %469 = vmatprep.mubr.bf16.mxu0 0
        %470 = vmatmul.mubr.bf16.gmra.mxu0 %v425
        %v471 = vpop.f32.mrf.mxu0
        %v472 = vadd.f32 0.0, %v471
        %v473 = vpop.f32.mrf.mxu0
        %v474 = vadd.f32 0.0, %v473
        %v475 = vpop.f32.mrf.mxu0
        %v476 = vpop.f32.mrf.mxu0
        %477 = vdwg.mxu0
        %478 = vmatprep.subr.bf16.mxu0 0
        %479 = vmatpush1.bf16.msra.mxu0 0
        %480 = vmatprep.subr.bf16.mxu0 0
        %481 = vmatpush1.bf16.msra.mxu0 0
        %482 = vmatprep.subr.bf16.mxu0 0
        %483 = vmatpush1.bf16.msra.mxu0 0
        %484 = vmatprep.subr.bf16.mxu0 0
        %485 = vmatpush1.bf16.msra.mxu0 0
        %486 = vmatprep.subr.bf16.mxu0 0
        %487 = vmatpush1.bf16.msra.mxu0 0
        %488 = vmatprep.subr.bf16.mxu0 0
        %489 = vmatpush1.bf16.msra.mxu0 %v435
        %490 = vmatprep.subr.bf16.mxu0 0
        %491 = vmatpush1.bf16.msra.mxu0 %v413
        %492 = vmatprep.subr.bf16.mxu0 0
        %493 = vmatpush1.bf16.msra.mxu0 %v410
        %494 = vmatprep.subr.bf16.mxu0 0
        %495 = vmatpush2.bf16.msra.mxu0 0
        %496 = vmatprep.subr.bf16.mxu0 0
        %497 = vmatpush2.bf16.msra.mxu0 0
        %498 = vmatprep.subr.bf16.mxu0 0
        %499 = vmatpush2.bf16.msra.mxu0 0
        %500 = vmatprep.subr.bf16.mxu0 0
        %501 = vmatpush2.bf16.msra.mxu0 0
        %502 = vmatprep.subr.bf16.mxu0 0
        %503 = vmatpush2.bf16.msra.mxu0 0
        %504 = vmatprep.subr.bf16.mxu0 0
        %505 = vmatpush2.bf16.msra.mxu0 0
        %506 = vmatprep.subr.bf16.mxu0 0
        %507 = vmatpush2.bf16.msra.mxu0 0
        %508 = vmatprep.subr.bf16.mxu0 0
        %509 = vmatpush2.bf16.msra.mxu0 0
        %510 = vmatprep.mubr.bf16.mxu0 0
        %511 = vmatmul.mubr.bf16.gmra.mxu0 %v425
        %v512 = vpop.f32.mrf.mxu0
        %v513 = vadd.f32 0.0, %v512
        %v514 = vpop.f32.mrf.mxu0
        %v515 = vpop.f32.mrf.mxu0
        %v516 = vpop.f32.mrf.mxu0
        %517 = vdwg.mxu0
        %v518 = vld [vmem:[%s2] sm:$0xff]
        %520 = vset.pattern.permute.xlu0 0
        %521 = vperm.xlu0 %520, %v518
        %v522 = vpop.permute.xlu0 %521
        %v524 = vmul.f32 %v472, %v522
        %v525 = vmul.f32 %v474, %v522
        %v526 = vmul.f32 %v513, %v522
        %v527 = vld [vmem:[%s3] sm:$0xff]
        %529 = vset.pattern.permute.xlu0 0
        %530 = vperm.xlu0 %529, %v527
        %v531 = vpop.permute.xlu0 %530
        %v533 = vadd.f32 %v524, %v531
        %v534 = vadd.f32 %v525, %v531
        %v535 = vadd.f32 %v526, %v531
        %v536 = vmax.f32 %v533, 0.0
        %v537 = vmax.f32 %v534, 0.0
        %v538 = vmax.f32 %v535, 0.0
        %v539 = vpack.c.bf16 %v536, %v536
        %v540 = vpack.c.bf16 %v537, %v537
        %v541 = vpack.c.bf16 %v538, %v538
        %v545 = vunpack.c.l.b16 %v539
        %v546 = vunpack.c.l.b16 %v540
        %v547 = vunpack.c.l.b16 %v541
        %v548 = vpack.c.b16 %v546, %v545
        %v549 = vpack.c.b16 %v547, %v547
        %552 = vst [vmem:[%s217] sm:$0xff] %v548
        %553 = vst [vmem:[%s217 + $0x8] sm:$0xf] %v549
        %s554 = sand.u32 %s130, 1
        %s555 = scalar_lea.sflag [#allocation5], %s554
        %s556 = sand.u32 %s130, 1
        %s557 = smul.addr %s556, 12
        %s558 = scalar_lea.vmem [#allocation6], %s557
        // Predicated region
        $region41: #{tpu_custom_call.1} parent=35 // pred_check
          %p559 = pneg %p140
        $region42: #{tpu_custom_call.1} parent=35 // pred_check_branch
          %561 = sbr.rel (%p559) target = $region44
        $region43: #{tpu_custom_call.1} parent=35 // pred_region
          %s562 = smul.u32 3, %s24
          %s564 = ssub.s32 192, 192
          %565 = vsyncadd %s555, %s564
          %s566 = smul.addr %s23, 3
          %s567 = sadd.s32 %s562, %s566
          %s568 = smul.addr %s567, 64
          %s569 = scalar_lea.hbm %s4, %s568
          %s571 = sshll.u32 %s558, 4
          %s572 = int_to_ptr.vmem [resolvable:$true] %s571
          %574 = dma.vmem_to_hbm [thread:$0]  %s572, 192, %s569, %s555
        $region44: #{tpu_custom_call.1} parent=35 // pred_fallthru
          _
      $region36: #{tpu_custom_call.1} parent=5 // pred_fallthru
        _
      %p575 = scmp.le.s32.totalorder 2, %s14
      // Predicated region
      $region45: #{tpu_custom_call.1} parent=5 // pred_check
        %p576 = pneg %p575
      $region46: #{tpu_custom_call.1} parent=5 // pred_check_branch
        %578 = sbr.rel (%p576) target = $region48
      $region47: #{tpu_custom_call.1} parent=5 // pred_region
        %s579 = ssub.s32 %s14, 2
        // Predicated region
        $region49: #{tpu_custom_call.1} parent=47 // pred_check
          %p580 = pneg %p146
        $region50: #{tpu_custom_call.1} parent=47 // pred_check_branch
          %582 = sbr.rel (%p580) target = $region52
        $region51: #{tpu_custom_call.1} parent=47 // pred_region
          %s583 = sand.u32 %s131, 1
          %s584 = scalar_lea.sflag [#allocation5], %s583
          %s585 = sand.u32 %s131, 1
          %s586 = smul.addr %s585, 12
          %s587 = scalar_lea.vmem [#allocation6], %s586
          %588 = dma.done %s584, 192
        $region52: #{tpu_custom_call.1} parent=47 // pred_fallthru
          _
      $region48: #{tpu_custom_call.1} parent=5 // pred_fallthru
        _
    $region6: #{tpu_custom_call.1} parent=1 // loop_footer
      %s18 = sadd.s32 1, %s14
    $region7: #{tpu_custom_call.1} parent=1 // loop_footer_branch
      %13 = sbr.rel target = $region3
    $region8: #{tpu_custom_call.1} parent=1 // loop_exit
      _
    %589 = vsyncpa [#allocation4], 1
    %s590 = scalar_lea.sflag [#allocation4], 1
    %591 = vsyncpa %s590, 1
    %592 = vsyncpa [#allocation5], 1
    %s593 = scalar_lea.sflag [#allocation5], 1
    %594 = vsyncpa %s593, 1

</llo_original>
